<compile_context>
chip_gen: v6e
topology: v6e:2x2x1
jax: 0.10.0
libtpu: 0.0.40
codegen_flags: <defaults>
</compile_context>

<pallas_src>
import functools

import jax
import jax.numpy as jnp
from jax.experimental import pallas as pl
from jax.experimental.pallas import tpu as pltpu


def _msa_kernel(x_ref, w_ref, b_ref, o_ref, *, n_heads, d_head):
    # x_ref: (TB, N, d) f32
    # w_ref: (d, 3*d) bf16 — per-head block-diagonal, pre-transposed (in, out),
    #         with the 1/sqrt(d_head) scale folded into the q block.
    # b_ref: (1, 3*d) f32  — q part pre-scaled.
    # o_ref: (TB, N, d)
    TB, N, d = x_ref.shape
    H, dh = n_heads, d_head

    # Fused q/k/v projection for all heads: one lane-dense MXU matmul with
    # M = TB*N rows and 3*d output columns; cast to bf16 ONCE after bias add.
    xb = x_ref[...].reshape(TB * N, d).astype(jnp.bfloat16)
    qkv = jnp.dot(xb, w_ref[...], preferred_element_type=jnp.float32) + b_ref[...]
    qkv = qkv.astype(jnp.bfloat16).reshape(TB, N, 3 * d)

    # Head-major repack: (H*TB, N, dh) so the attention matmuls and the
    # softmax run once, batched over all heads (no per-head unrolled body).
    def head_major(col0):
        return jnp.concatenate(
            [qkv[:, :, col0 + h * dh: col0 + (h + 1) * dh] for h in range(H)],
            axis=0)

    q = head_major(0)          # already scaled by 1/sqrt(dh) via the weights
    k = head_major(d)
    v = head_major(2 * d)

    s = jnp.einsum("bqd,bkd->bqk", q, k,
                   preferred_element_type=jnp.float32)     # (H*TB, N, N) f32
    s = s - jnp.max(s, axis=-1, keepdims=True)
    e = jnp.exp(s)                                          # f32 (v5e-safe)
    attn = (e * pl.reciprocal(jnp.sum(e, axis=-1, keepdims=True),
                              approx=True)).astype(jnp.bfloat16)
    o = jnp.einsum("bqk,bkd->bqd", attn, v,
                   preferred_element_type=jnp.float32)      # (H*TB, N, dh) f32

    # Re-pack heads onto the lane axis -> single lane-dense (TB, N, d) store
    # (matches torch.hstack over heads).
    o_ref[...] = jnp.concatenate(
        [o[h * TB:(h + 1) * TB] for h in range(H)], axis=-1).astype(o_ref.dtype)


def _vmem_estimate_bytes(tb, N, d, n_heads):
    """Rough per-grid-step VMEM footprint for the kernel above."""
    d_head = d // n_heads
    blk = tb * N * d * 4
    return (4 * blk                                   # double-buffered x + out blocks
            + tb * N * 3 * d * (4 + 2)                # f32 qkv matmul result + bf16 copy
            + n_heads * tb * N * N * (4 + 2)          # f32 scores + bf16 probs
            + n_heads * tb * N * d_head * (3 * 2 + 4) # head-major q/k/v bf16 + o f32
            + d * 3 * d * 2 * 2                       # bf16 weight (x2 buffers)
            + 3 * d * 4 * 2)                          # f32 bias (x2 buffers)


def _pick_batch_tile(B, N, d, n_heads, vmem_budget_bytes):
    """Largest divisor of B whose block lands in the DMA sweet spot, fits the
    VMEM budget, and keeps >= 2 grid steps (v7x has 2 TensorCores)."""
    best = 1
    for tb in range(1, B + 1):
        if B % tb:
            continue
        if B >= 2 and B // tb < 2:
            continue
        if tb * N * d * 4 > 4 * 2 ** 20:          # keep blocks <= ~4 MiB
            continue
        if _vmem_estimate_bytes(tb, N, d, n_heads) > vmem_budget_bytes:
            continue
        best = tb
    return best


def my_msa_pallas(x, wq, bq, wk, bk, wv, bv, n_heads, batch_tile=None,
                  vmem_budget_bytes=24 * 2 ** 20):
    """x: (B, N, d); wq/wk/wv: (n_heads, d_head, d_head) in nn.Linear (out, in)
    layout; bq/bk/bv: (n_heads, d_head).

    batch_tile: rows of the batch processed per grid step (tuning knob).
      None -> auto-picked so the per-step block is as large as possible under
      `vmem_budget_bytes` (keep the default budget ~24 MiB on v7x; it can be
      raised toward ~64 MiB on v5e/v6e which have 128 MiB VMEM)."""
    B, N, d = x.shape
    d_head = d // n_heads
    if batch_tile is None:
        batch_tile = _pick_batch_tile(B, N, d, n_heads, vmem_budget_bytes)
    assert B % batch_tile == 0

    scale = 1.0 / (d_head ** 0.5)

    # Per-head (out, in) weights -> block-diagonal (in, out) matrix so that
    # (x @ W)[:, h*dh:(h+1)*dh] == x[:, h*dh:(h+1)*dh] @ w[h].T. The softmax
    # scale is folded into the q block (and bq) so the kernel has no `* scale`.
    def block_diag_t(w, s=1.0):
        m = jnp.zeros((d, d), jnp.float32)
        for h in range(n_heads):
            lo, hi = h * d_head, (h + 1) * d_head
            m = m.at[lo:hi, lo:hi].set(w[h].T * s)
        return m

    w_qkv = jnp.concatenate(
        [block_diag_t(wq, scale), block_diag_t(wk), block_diag_t(wv)],
        axis=1).astype(jnp.bfloat16)                          # (d, 3*d)
    b_qkv = jnp.concatenate(
        [bq.reshape(-1) * scale, bk.reshape(-1), bv.reshape(-1)]
    ).reshape(1, 3 * d).astype(jnp.float32)

    kernel = functools.partial(_msa_kernel, n_heads=n_heads, d_head=d_head)

    # Explicit VMEM limit: 2x headroom over the estimate, clamped to a range
    # that is safe on every generation (v7x physical VMEM is 64 MiB).
    vmem_limit = int(min(max(2 * _vmem_estimate_bytes(batch_tile, N, d, n_heads),
                             16 * 2 ** 20), 64 * 2 ** 20))

    return pl.pallas_call(
        kernel,
        out_shape=jax.ShapeDtypeStruct((B, N, d), x.dtype),
        grid_spec=pltpu.PrefetchScalarGridSpec(
            num_scalar_prefetch=0,
            grid=(B // batch_tile,),
            in_specs=[
                pl.BlockSpec((batch_tile, N, d), lambda i: (i, 0, 0)),
                # Constant index_map -> DMA'd once and revisited across the grid.
                pl.BlockSpec((d, 3 * d), lambda i: (0, 0)),
                pl.BlockSpec((1, 3 * d), lambda i: (0, 0)),
            ],
            out_specs=pl.BlockSpec((batch_tile, N, d), lambda i: (i, 0, 0)),
        ),
        compiler_params=pltpu.CompilerParams(
            dimension_semantics=("parallel",),
            vmem_limit_bytes=vmem_limit),
    )(x, w_qkv, b_qkv)


def my_msa_ref(x, wq, bq, wk, bk, wv, bv, n_heads):
    """Pure-JAX f32 reference mirroring the PyTorch forward loop."""
    B, N, d = x.shape
    d_head = d // n_heads
    outs = []
    for b in range(B):
        heads = []
        for h in range(n_heads):
            seq = x[b, :, h * d_head:(h + 1) * d_head]
            q = seq @ wq[h].T + bq[h]
            k = seq @ wk[h].T + bk[h]
            v = seq @ wv[h].T + bv[h]
            attn = jax.nn.softmax(q @ k.T / (d_head ** 0.5), axis=-1)
            heads.append(attn @ v)
        outs.append(jnp.concatenate(heads, axis=-1))
    return jnp.stack(outs, axis=0)


if __name__ == "__main__":
    B, N, d, n_heads = 2, 8, 32, 2
    d_head = d // n_heads

    key = jax.random.PRNGKey(0)
    kx, kwq, kbq, kwk, kbk, kwv, kbv = jax.random.split(key, 7)

    x = jax.random.normal(kx, (B, N, d), dtype=jnp.float32)
    # Deterministic synthetic parameters (nn.Linear-style shapes (out, in)).
    scale = 1.0 / (d_head ** 0.5)
    wq = jax.random.uniform(kwq, (n_heads, d_head, d_head), jnp.float32,
                            -scale, scale)
    bq = jax.random.uniform(kbq, (n_heads, d_head), jnp.float32, -scale, scale)
    wk = jax.random.uniform(kwk, (n_heads, d_head, d_head), jnp.float32,
                            -scale, scale)
    bk = jax.random.uniform(kbk, (n_heads, d_head), jnp.float32, -scale, scale)
    wv = jax.random.uniform(kwv, (n_heads, d_head, d_head), jnp.float32,
                            -scale, scale)
    bv = jax.random.uniform(kbv, (n_heads, d_head), jnp.float32, -scale, scale)

    out = my_msa_pallas(x, wq, bq, wk, bk, wv, bv, n_heads)
    out = jax.block_until_ready(out)

    ref = my_msa_ref(x, wq, bq, wk, bk, wv, bv, n_heads)
    assert out.shape == (B, N, d)
    # bf16 MXU operands + approx reciprocal -> ~1e-2 relative vs f32 reference.
    assert jnp.allclose(out, ref, atol=2e-2, rtol=2e-2), float(
        jnp.max(jnp.abs(out - ref)))

    print("KERNEL_OK")
</pallas_src>

<mosaic_0001>
module attributes {stable_mosaic.version = 11 : i64} {
  func.func @_msa_kernel(%arg0: i32, %arg1: memref<1x8x32xf32, #tpu.memory_space<vmem>>, %arg2: memref<32x96xbf16, #tpu.memory_space<vmem>>, %arg3: memref<1x96xf32, #tpu.memory_space<vmem>>, %arg4: memref<1x8x32xf32, #tpu.memory_space<vmem>>) attributes {dimension_semantics = [#tpu.dimension_semantics<parallel>], iteration_bounds = array<i64: 2>, scalar_prefetch = 0 : i64, scratch_operands = 0 : i64, tpu.core_type = #tpu.core_type<tc>, window_params = [{transform_indices = @transform_0, window_bounds = array<i64: 1, 8, 32>}, {pipeline_mode = #tpu.pipeline_mode<synchronous>, transform_indices = @transform_1, window_bounds = array<i64: 32, 96>}, {pipeline_mode = #tpu.pipeline_mode<synchronous>, transform_indices = @transform_2, window_bounds = array<i64: 1, 96>}, {transform_indices = @transform_3, window_bounds = array<i64: 1, 8, 32>}]} {
    %c0 = arith.constant 0 : index
    %c0_0 = arith.constant 0 : index
    %c0_1 = arith.constant 0 : index
    %0 = vector.load %arg1[%c0, %c0_0, %c0_1] : memref<1x8x32xf32, #tpu.memory_space<vmem>>, vector<1x8x32xf32>
    %1 = vector.shape_cast %0 : vector<1x8x32xf32> to vector<8x32xf32>
    %2 = arith.truncf %1 : vector<8x32xf32> to vector<8x32xbf16>
    %c0_2 = arith.constant 0 : index
    %c0_3 = arith.constant 0 : index
    %3 = vector.load %arg2[%c0_2, %c0_3] : memref<32x96xbf16, #tpu.memory_space<vmem>>, vector<32x96xbf16>
    %cst = arith.constant dense<0.000000e+00> : vector<8x96xf32>
    %4 = tpu.matmul %2, %3, %cst {dimension_numbers = #tpu.dot_dimension_numbers<[1], [0], [0], [1], [0, 0, 1, 1], [], []>} : vector<8x32xbf16>, vector<32x96xbf16>, vector<8x96xf32> -> vector<8x96xf32>
    %c0_4 = arith.constant 0 : index
    %c0_5 = arith.constant 0 : index
    %5 = vector.load %arg3[%c0_4, %c0_5] : memref<1x96xf32, #tpu.memory_space<vmem>>, vector<1x96xf32>
    %6 = vector.broadcast %5 : vector<1x96xf32> to vector<8x96xf32>
    %7 = arith.addf %4, %6 : vector<8x96xf32>
    %8 = arith.truncf %7 : vector<8x96xf32> to vector<8x96xbf16>
    %9 = vector.shape_cast %8 : vector<8x96xbf16> to vector<1x8x96xbf16>
    %10 = vector.extract_strided_slice %9 {offsets = [0, 0, 0], sizes = [1, 8, 16], strides = [1, 1, 1]} : vector<1x8x96xbf16> to vector<1x8x16xbf16>
    %11 = vector.extract_strided_slice %9 {offsets = [0, 0, 16], sizes = [1, 8, 16], strides = [1, 1, 1]} : vector<1x8x96xbf16> to vector<1x8x16xbf16>
    %12 = tpu.concatenate %10, %11 in 0 : vector<1x8x16xbf16>, vector<1x8x16xbf16> -> vector<2x8x16xbf16>
    %13 = vector.extract_strided_slice %9 {offsets = [0, 0, 32], sizes = [1, 8, 16], strides = [1, 1, 1]} : vector<1x8x96xbf16> to vector<1x8x16xbf16>
    %14 = vector.extract_strided_slice %9 {offsets = [0, 0, 48], sizes = [1, 8, 16], strides = [1, 1, 1]} : vector<1x8x96xbf16> to vector<1x8x16xbf16>
    %15 = tpu.concatenate %13, %14 in 0 : vector<1x8x16xbf16>, vector<1x8x16xbf16> -> vector<2x8x16xbf16>
    %16 = vector.extract_strided_slice %9 {offsets = [0, 0, 64], sizes = [1, 8, 16], strides = [1, 1, 1]} : vector<1x8x96xbf16> to vector<1x8x16xbf16>
    %17 = vector.extract_strided_slice %9 {offsets = [0, 0, 80], sizes = [1, 8, 16], strides = [1, 1, 1]} : vector<1x8x96xbf16> to vector<1x8x16xbf16>
    %18 = tpu.concatenate %16, %17 in 0 : vector<1x8x16xbf16>, vector<1x8x16xbf16> -> vector<2x8x16xbf16>
    "tpu.trace_start"() <{level = 10 : i32, message = "bqd,bkd->bqk"}> : () -> ()
    %cst_6 = arith.constant dense<0.000000e+00> : vector<2x8x8xf32>
    %19 = tpu.matmul %12, %15, %cst_6 {dimension_numbers = #tpu.dot_dimension_numbers<[2], [2], [1], [1], [0, 0, 0, 1, 1, 1], [0], [0]>} : vector<2x8x16xbf16>, vector<2x8x16xbf16>, vector<2x8x8xf32> -> vector<2x8x8xf32>
    "tpu.trace_stop"() : () -> ()
    %cst_7 = arith.constant dense<0xFF800000> : vector<2x8xf32>
    %20 = vector.multi_reduction <maximumf>, %19, %cst_7 [2] : vector<2x8x8xf32> to vector<2x8xf32>
    %21 = vector.shape_cast %20 : vector<2x8xf32> to vector<2x8x1xf32>
    %22 = vector.broadcast %21 : vector<2x8x1xf32> to vector<2x8x8xf32>
    %23 = arith.subf %19, %22 : vector<2x8x8xf32>
    %24 = math.exp %23 : vector<2x8x8xf32>
    %cst_8 = arith.constant dense<0.000000e+00> : vector<2x8xf32>
    %25 = vector.multi_reduction <add>, %24, %cst_8 [2] : vector<2x8x8xf32> to vector<2x8xf32>
    %26 = vector.shape_cast %25 : vector<2x8xf32> to vector<2x8x1xf32>
    %27 = tpu.reciprocal %26 {approx = true} : vector<2x8x1xf32> -> vector<2x8x1xf32>
    %28 = vector.broadcast %27 : vector<2x8x1xf32> to vector<2x8x8xf32>
    %29 = arith.mulf %24, %28 : vector<2x8x8xf32>
    %30 = arith.truncf %29 : vector<2x8x8xf32> to vector<2x8x8xbf16>
    "tpu.trace_start"() <{level = 10 : i32, message = "bqk,bkd->bqd"}> : () -> ()
    %cst_9 = arith.constant dense<0.000000e+00> : vector<2x8x16xf32>
    %31 = tpu.matmul %30, %18, %cst_9 {dimension_numbers = #tpu.dot_dimension_numbers<[2], [1], [1], [2], [0, 0, 0, 1, 1, 2], [0], [0]>} : vector<2x8x8xbf16>, vector<2x8x16xbf16>, vector<2x8x16xf32> -> vector<2x8x16xf32>
    "tpu.trace_stop"() : () -> ()
    %32 = vector.extract_strided_slice %31 {offsets = [0, 0, 0], sizes = [1, 8, 16], strides = [1, 1, 1]} : vector<2x8x16xf32> to vector<1x8x16xf32>
    %33 = vector.extract_strided_slice %31 {offsets = [1, 0, 0], sizes = [1, 8, 16], strides = [1, 1, 1]} : vector<2x8x16xf32> to vector<1x8x16xf32>
    %34 = tpu.concatenate %32, %33 in 2 : vector<1x8x16xf32>, vector<1x8x16xf32> -> vector<1x8x32xf32>
    %c0_10 = arith.constant 0 : index
    %c0_11 = arith.constant 0 : index
    %c0_12 = arith.constant 0 : index
    %35 = vector.load %arg4[%c0_10, %c0_11, %c0_12] : memref<1x8x32xf32, #tpu.memory_space<vmem>>, vector<1x8x32xf32>
    tpu.vector_store %arg4[%c0_10, %c0_11, %c0_12], %34 {strides = array<i32>} : memref<1x8x32xf32, #tpu.memory_space<vmem>>, vector<1x8x32xf32>,
    return
  }
  func.func @transform_0(%arg0: i32) -> (i32, i32, i32) {
    %c0_i32 = arith.constant 0 : i32
    %c0_i32_0 = arith.constant 0 : i32
    %c0_i32_1 = arith.constant 0 : i32
    return %arg0, %c0_i32, %c0_i32_0 : i32, i32, i32
  }
  func.func @transform_1(%arg0: i32) -> (i32, i32) {
    %c0_i32 = arith.constant 0 : i32
    %c0_i32_0 = arith.constant 0 : i32
    %c0_i32_1 = arith.constant 0 : i32
    return %c0_i32, %c0_i32_0 : i32, i32
  }
  func.func @transform_2(%arg0: i32) -> (i32, i32) {
    %c0_i32 = arith.constant 0 : i32
    %c0_i32_0 = arith.constant 0 : i32
    %c0_i32_1 = arith.constant 0 : i32
    return %c0_i32, %c0_i32_0 : i32, i32
  }
  func.func @transform_3(%arg0: i32) -> (i32, i32, i32) {
    %c0_i32 = arith.constant 0 : i32
    %c0_i32_0 = arith.constant 0 : i32
    %c0_i32_1 = arith.constant 0 : i32
    return %arg0, %c0_i32, %c0_i32_0 : i32, i32, i32
  }
}

</mosaic_0001>

<llo_original>
// kernel: tpu_custom_call.1
$region0: #{tpu_custom_call.1}
  #allocation0 [shape = 'u32[]', space=smem, size = 0x4, offset = 0x4, fixed_abs, tag = 'smem constant byte address 0x4 - core index']
  #allocation1 [shape = 'u32[144,128]{1,0:T(1,128)}', space=vmem, size = 0x12000, scoped, tag = 'internal scratch']
  %s0 = inlined_call_operand.hbm [shape: f32[2,8,32], index: 0, kind: input, shape index: {}]
  %s1 = inlined_call_operand.hbm [shape: bf16[32,96], index: 1, kind: input, shape index: {}]
  %s2 = inlined_call_operand.vmem [shape: f32[1,96], index: 2, kind: input, shape index: {}]
  %s3 = inlined_call_operand.hbm [shape: f32[2,8,32], index: 3, kind: output, shape index: {}]
  %s4 = sld [smem:[#allocation0]]
  $region53: #{tpu_custom_call.1} parent=0
    _
  %s6 = ssub.s32 1, %s4
  %s7 = scalar_select 0, %s6, %s4
  $region1: #{tpu_custom_call.1} parent=0
    #allocation2 [shape = 'u8[8192]{0}', space=vmem, size = 0x2000, scoped, tag = 'input window, operand 0']
    #allocation3 [shape = 's32[2]{0}', space=sflag, size = 0x8, scoped, tag = 'scoped memory for tpu_custom_call.1']
    #allocation4 [shape = 's32[2]{0}', space=sflag, size = 0x8, scoped, tag = 'scoped memory for tpu_custom_call.1']
    #allocation5 [shape = 'u8[8192]{0}', space=vmem, size = 0x2000, scoped, tag = 'input window, operand 1, single buffered']
    #allocation6 [shape = 's32[1]{0}', space=sflag, size = 0x4, scoped, tag = 'scoped memory for tpu_custom_call.1']
    #allocation7 [shape = 'u8[8192]{0}', space=vmem, size = 0x2000, scoped, tag = 'output window, operand 0']
    %8 = vsyncpa [#allocation3], 0
    %s9 = scalar_lea.sflag [#allocation3], 1
    %10 = vsyncpa %s9, 0
    %11 = vsyncpa [#allocation6], 0
    %12 = vsyncpa [#allocation4], 0
    %s13 = scalar_lea.sflag [#allocation4], 1
    %14 = vsyncpa %s13, 0
    loop: start=0, step=1, limit=4
    $region2: #{tpu_custom_call.1} parent=1 // loop_pre_header
      _
    $region3: #{tpu_custom_call.1} parent=1 // loop_header
      %s16 = sphi 0, %s20
      %p17 = scmp.ge.s32.totalorder %s16, 4
      %s26 = sphi 0, %s28
      %s29 = sphi 0, %s26
      %s30 = sphi 0, %s29
      %s46 = sphi 0, %s30
      %s50 = sphi 0, %s50
      %s52 = sphi 0, %s50
      %s53 = sphi 0, %s52
      %s67 = sphi 0, %s53
      %s71 = sphi 0, %s71
      %s73 = sphi 0, %s71
      %s74 = sphi 0, %s73
      %s88 = sphi 0, %s74
      %s94 = sphi 0, %s96
      %s97 = sphi 0, %s94
      %s98 = sphi 0, %s97
      %s114 = sphi 0, %s98
    $region4: #{tpu_custom_call.1} parent=1 // loop_header_branch
      %19 = sbr.rel (%p17) target = $region8
    $region5: #{tpu_custom_call.1} parent=1 // loop_body
      %s21 = ssub.s32 %s16, 1
      %s22 = ssub.s32 %s16, 2
      %s23 = sadd.s32 %s16, 1
      %s24 = ssub.s32 %s16, %s23
      %p25 = scmp.eq.s32.totalorder %s24, 0
      %s27 = sadd.s32 %s26, 1
      %s28 = scalar_select %p25, %s26, %s27
      %p31 = pneg %p25
      %p32 = scmp.eq.s32.totalorder %s16, 1
      %p33 = por %p31, %p32
      %p34 = scmp.ne.s32.totalorder %s26, %s29
      %p35 = scmp.eq.s32.totalorder %s16, 0
      %p36 = por %p34, %p35
      %p37 = scmp.ne.s32.totalorder %s26, %s29
      %p38 = scmp.eq.s32.totalorder %s21, 1
      %p39 = por %p37, %p38
      %p40 = scmp.ne.s32.totalorder %s29, %s30
      %p41 = scmp.eq.s32.totalorder %s21, 0
      %p42 = por %p40, %p41
      %p43 = scmp.ne.s32.totalorder %s29, %s30
      %p44 = scmp.eq.s32.totalorder %s22, 1
      %p45 = por %p43, %p44
      %p47 = scmp.ne.s32.totalorder %s30, %s46
      %p48 = scmp.eq.s32.totalorder %s22, 0
      %p49 = por %p47, %p48
      %s51 = sadd.s32 %s50, 1
      %p54 = scmp.eq.s32.totalorder %s16, 1
      %p55 = scmp.ne.s32.totalorder %s50, %s52
      %p56 = scmp.eq.s32.totalorder %s16, 0
      %p57 = por %p55, %p56
      %p58 = scmp.ne.s32.totalorder %s50, %s52
      %p59 = scmp.eq.s32.totalorder %s21, 1
      %p60 = por %p58, %p59
      %p61 = scmp.ne.s32.totalorder %s52, %s53
      %p62 = scmp.eq.s32.totalorder %s21, 0
      %p63 = por %p61, %p62
      %p64 = scmp.ne.s32.totalorder %s52, %s53
      %p65 = scmp.eq.s32.totalorder %s22, 1
      %p66 = por %p64, %p65
      %p68 = scmp.ne.s32.totalorder %s53, %s67
      %p69 = scmp.eq.s32.totalorder %s22, 0
      %p70 = por %p68, %p69
      %s72 = sadd.s32 %s71, 1
      %p75 = scmp.eq.s32.totalorder %s16, 1
      %p76 = scmp.ne.s32.totalorder %s71, %s73
      %p77 = scmp.eq.s32.totalorder %s16, 0
      %p78 = por %p76, %p77
      %p79 = scmp.ne.s32.totalorder %s71, %s73
      %p80 = scmp.eq.s32.totalorder %s21, 1
      %p81 = por %p79, %p80
      %p82 = scmp.ne.s32.totalorder %s73, %s74
      %p83 = scmp.eq.s32.totalorder %s21, 0
      %p84 = por %p82, %p83
      %p85 = scmp.ne.s32.totalorder %s73, %s74
      %p86 = scmp.eq.s32.totalorder %s22, 1
      %p87 = por %p85, %p86
      %p89 = scmp.ne.s32.totalorder %s74, %s88
      %p90 = scmp.eq.s32.totalorder %s22, 0
      %p91 = por %p89, %p90
      %s92 = ssub.s32 %s16, %s23
      %p93 = scmp.eq.s32.totalorder %s92, 0
      %s95 = sadd.s32 %s94, 1
      %s96 = scalar_select %p93, %s94, %s95
      %p99 = pneg %p93
      %p100 = scmp.eq.s32.totalorder %s16, 1
      %p101 = por %p99, %p100
      %p102 = scmp.ne.s32.totalorder %s94, %s97
      %p103 = scmp.eq.s32.totalorder %s16, 0
      %p104 = por %p102, %p103
      %p105 = scmp.ne.s32.totalorder %s94, %s97
      %p106 = scmp.eq.s32.totalorder %s21, 1
      %p107 = por %p105, %p106
      %p108 = scmp.ne.s32.totalorder %s97, %s98
      %p109 = scmp.eq.s32.totalorder %s21, 0
      %p110 = por %p108, %p109
      %p111 = scmp.ne.s32.totalorder %s97, %s98
      %p112 = scmp.eq.s32.totalorder %s22, 1
      %p113 = por %p111, %p112
      %p115 = scmp.ne.s32.totalorder %s98, %s114
      %p116 = scmp.eq.s32.totalorder %s22, 0
      %p117 = por %p115, %p116
      %p118 = scmp.le.s32.totalorder 1, %s16
      %p119 = scmp.lt.s32.totalorder %s16, 3
      %p120 = pnand %p118, %p119
      %p121 = pneg %p120
      // Predicated region
      $region9: #{tpu_custom_call.1} parent=5 // pred_check
        _
      $region10: #{tpu_custom_call.1} parent=5 // pred_check_branch
        %123 = sbr.rel (%p120) target = $region12
      $region11: #{tpu_custom_call.1} parent=5 // pred_region
        %s124 = ssub.s32 %s16, 1
        // Predicated region
        $region13: #{tpu_custom_call.1} parent=11 // pred_check
          %p125 = pneg %p63
        $region14: #{tpu_custom_call.1} parent=11 // pred_check_branch
          %127 = sbr.rel (%p125) target = $region16
        $region15: #{tpu_custom_call.1} parent=11 // pred_region
          %s129 = ssub.s32 256, 256
          %130 = vsyncadd [#allocation6], %s129
          %s131 = sshll.u32 [#allocation5], 4
          %s132 = int_to_ptr.vmem [resolvable:$true] %s131
          %137 = dma.hbm_to_vmem [thread:$0]  %s1, 256, %s132, [#allocation6], 64, 64, 4
        $region16: #{tpu_custom_call.1} parent=11 // pred_fallthru
          _
        // Predicated region
        $region17: #{tpu_custom_call.1} parent=11 // pred_check
          %p138 = pneg %p84
        $region18: #{tpu_custom_call.1} parent=11 // pred_check_branch
          %140 = sbr.rel (%p138) target = $region20
        $region19: #{tpu_custom_call.1} parent=11 // pred_region
          _
        $region20: #{tpu_custom_call.1} parent=11 // pred_fallthru
          _
      $region12: #{tpu_custom_call.1} parent=5 // pred_fallthru
        _
      %p141 = scmp.lt.s32.totalorder %s16, 2
      // Predicated region
      $region21: #{tpu_custom_call.1} parent=5 // pred_check
        %p142 = pneg %p141
      $region22: #{tpu_custom_call.1} parent=5 // pred_check_branch
        %144 = sbr.rel (%p142) target = $region24
      $region23: #{tpu_custom_call.1} parent=5 // pred_region
        // Predicated region
        $region25: #{tpu_custom_call.1} parent=23 // pred_check
          %p145 = pneg %p36
        $region26: #{tpu_custom_call.1} parent=23 // pred_check_branch
          %147 = sbr.rel (%p145) target = $region28
        $region27: #{tpu_custom_call.1} parent=23 // pred_region
          %s148 = sand.u32 %s26, 1
          %s149 = scalar_lea.sflag [#allocation3], %s148
          %s150 = sand.u32 %s26, 1
          %s151 = smul.addr %s150, 8
          %s152 = scalar_lea.vmem [#allocation2], %s151
          %s154 = ssub.s32 128, 128
          %155 = vsyncadd %s149, %s154
          %s156 = smul.addr %s16, 128
          %s157 = scalar_lea.hbm %s0, %s156
          %s159 = sshll.u32 %s152, 4
          %s160 = int_to_ptr.vmem [resolvable:$true] %s159
          %162 = dma.hbm_to_vmem [thread:$0]  %s157, 128, %s160, %s149
        $region28: #{tpu_custom_call.1} parent=23 // pred_fallthru
          _
      $region24: #{tpu_custom_call.1} parent=5 // pred_fallthru
        _
      %p163 = scmp.le.s32.totalorder 1, %s16
      %p164 = scmp.lt.s32.totalorder %s16, 3
      %p165 = pnand %p163, %p164
      %p166 = pneg %p165
      // Predicated region
      $region29: #{tpu_custom_call.1} parent=5 // pred_check
        _
      $region30: #{tpu_custom_call.1} parent=5 // pred_check_branch
        %168 = sbr.rel (%p165) target = $region32
      $region31: #{tpu_custom_call.1} parent=5 // pred_region
        %s169 = ssub.s32 %s16, 1
        %s170 = sand.u32 %s29, 1
        %s171 = scalar_lea.sflag [#allocation3], %s170
        %s172 = sand.u32 %s29, 1
        %s173 = smul.addr %s172, 8
        %s174 = scalar_lea.vmem [#allocation2], %s173
        // Predicated region
        $region33: #{tpu_custom_call.1} parent=31 // pred_check
          %p175 = pneg %p42
        $region34: #{tpu_custom_call.1} parent=31 // pred_check_branch
          %177 = sbr.rel (%p175) target = $region36
        $region35: #{tpu_custom_call.1} parent=31 // pred_region
          %178 = dma.done %s171, 128
        $region36: #{tpu_custom_call.1} parent=31 // pred_fallthru
          _
        // Predicated region
        $region37: #{tpu_custom_call.1} parent=31 // pred_check
          %p179 = pneg %p63
        $region38: #{tpu_custom_call.1} parent=31 // pred_check_branch
          %181 = sbr.rel (%p179) target = $region40
        $region39: #{tpu_custom_call.1} parent=31 // pred_region
          %182 = dma.done [#allocation6], 256
        $region40: #{tpu_custom_call.1} parent=31 // pred_fallthru
          _
        %s183 = sand.u32 %s29, 1
        %s184 = scalar_lea.sflag [#allocation3], %s183
        %s185 = sand.u32 %s29, 1
        %s186 = smul.addr %s185, 8
        %s187 = scalar_lea.vmem [#allocation2], %s186
        %p188 = pneg %p42
        %p189 = pneg %p39
        %p190 = pneg %p63
        %p191 = pneg %p60
        %p192 = pneg %p84
        %p193 = pneg %p81
        %p194 = pneg %p110
        %p195 = pneg %p107
        %s196 = sand.u32 %s97, 1
        %s197 = scalar_lea.sflag [#allocation4], %s196
        %s198 = sand.u32 %s97, 1
        %s199 = smul.addr %s198, 8
        %s200 = scalar_lea.vmem [#allocation7], %s199
        %v202 = vld [vmem:[%s174] sm:$0xff]
        %v203 = vpack.c.bf16 %v202, %v202
        %v204 = vld [vmem:[#allocation5] sm:$0xf]
        %v205 = vld [vmem:[#allocation5 + $0x4] sm:$0xf]
        %v206 = vld [vmem:[#allocation5 + $0x8] sm:$0xf]
        %v207 = vld [vmem:[#allocation5 + $0xc] sm:$0xf]
        %v208 = vld [vmem:[%s2] sm:$0x1]
        %v210 = vlaneseq
        %v211 = vshrl.u32 %v210, 7
        %v212 = vsub.s32 0, %v211
        %v213 = vrot.slane %v208, %v212
        %v219 = vunpack.c.l.b16 %v204
        %v220 = vunpack.c.l.b16 %v205
        %v221 = vunpack.c.l.b16 %v206
        %v222 = vunpack.c.l.b16 %v207
        %v223 = vpack.c.b16 %v220, %v219
        %v224 = vpack.c.b16 %v222, %v221
        %vm227 = vcmask 261120
        %v229 = vsel %vm227, %v203, 0
        %231 = vmatprep.subr.bf16.mxu0 0
        %232 = vmatpush1.bf16.msra.mxu0 0
        %233 = vmatprep.subr.bf16.mxu0 0
        %234 = vmatpush1.bf16.msra.mxu0 0
        %235 = vmatprep.subr.bf16.mxu0 0
        %236 = vmatpush1.bf16.msra.mxu0 0
        %237 = vmatprep.subr.bf16.mxu0 0
        %238 = vmatpush1.bf16.msra.mxu0 0
        %239 = vmatprep.subr.bf16.mxu0 0
        %240 = vmatpush1.bf16.msra.mxu0 0
        %241 = vmatprep.subr.bf16.mxu0 0
        %242 = vmatpush1.bf16.msra.mxu0 0
        %243 = vmatprep.subr.bf16.mxu0 0
        %244 = vmatpush1.bf16.msra.mxu0 %v224
        %245 = vmatprep.subr.bf16.mxu0 0
        %246 = vmatpush1.bf16.msra.mxu0 %v223
        %247 = vmatprep.subr.bf16.mxu0 0
        %248 = vmatpush2.bf16.msra.mxu0 0
        %249 = vmatprep.subr.bf16.mxu0 0
        %250 = vmatpush2.bf16.msra.mxu0 0
        %251 = vmatprep.subr.bf16.mxu0 0
        %252 = vmatpush2.bf16.msra.mxu0 0
        %253 = vmatprep.subr.bf16.mxu0 0
        %254 = vmatpush2.bf16.msra.mxu0 0
        %255 = vmatprep.subr.bf16.mxu0 0
        %256 = vmatpush2.bf16.msra.mxu0 0
        %257 = vmatprep.subr.bf16.mxu0 0
        %258 = vmatpush2.bf16.msra.mxu0 0
        %259 = vmatprep.subr.bf16.mxu0 0
        %260 = vmatpush2.bf16.msra.mxu0 0
        %261 = vmatprep.subr.bf16.mxu0 0
        %262 = vmatpush2.bf16.msra.mxu0 0
        %263 = vmatprep.mubr.bf16.mxu0 0
        %264 = vmatmul.mubr.bf16.gmra.mxu0 %v229
        %v265 = vpop.f32.mrf.mxu0
        %v266 = vadd.f32 %v213, %v265
        %v267 = vpop.f32.mrf.mxu0
        %v268 = vpop.f32.mrf.mxu0
        %v269 = vpop.f32.mrf.mxu0
        %270 = vdwg.mxu0
        %v271 = vpack.c.bf16 %v266, %v266
        %273 = vrot.lane.b32.xlu0 %v271, 112
        %v274 = vpop.permute.xlu0 %273
        %275 = vrot.lane.b32.xlu0 %v271, 96
        %v276 = vpop.permute.xlu0 %275
        %vm277 = vcmask 130048
        %v279 = vsel %vm277, %v271, 0
        %v282 = vsel %vm277, %v276, 0
        %284 = vmatprep.subr.bf16.mxu0 0
        %285 = vmatpush1.bf16.xpose.msra.mxu0 0
        %286 = vmatprep.subr.bf16.mxu0 0
        %287 = vmatpush1.bf16.xpose.msra.mxu0 0
        %288 = vmatprep.subr.bf16.mxu0 0
        %289 = vmatpush1.bf16.xpose.msra.mxu0 0
        %290 = vmatprep.subr.bf16.mxu0 0
        %291 = vmatpush1.bf16.xpose.msra.mxu0 0
        %292 = vmatprep.subr.bf16.mxu0 0
        %293 = vmatpush1.bf16.xpose.msra.mxu0 0
        %294 = vmatprep.subr.bf16.mxu0 0
        %295 = vmatpush1.bf16.xpose.msra.mxu0 0
        %296 = vmatprep.subr.bf16.mxu0 0
        %297 = vmatpush1.bf16.xpose.msra.mxu0 0
        %298 = vmatprep.subr.bf16.mxu0 0
        %299 = vmatpush1.bf16.xpose.msra.mxu0 %v282
        %300 = vmatprep.subr.bf16.mxu0 0
        %301 = vmatpush2.bf16.xpose.msra.mxu0 0
        %302 = vmatprep.subr.bf16.mxu0 0
        %303 = vmatpush2.bf16.xpose.msra.mxu0 0
        %304 = vmatprep.subr.bf16.mxu0 0
        %305 = vmatpush2.bf16.xpose.msra.mxu0 0
        %306 = vmatprep.subr.bf16.mxu0 0
        %307 = vmatpush2.bf16.xpose.msra.mxu0 0
        %308 = vmatprep.subr.bf16.mxu0 0
        %309 = vmatpush2.bf16.xpose.msra.mxu0 0
        %310 = vmatprep.subr.bf16.mxu0 0
        %311 = vmatpush2.bf16.xpose.msra.mxu0 0
        %312 = vmatprep.subr.bf16.mxu0 0
        %313 = vmatpush2.bf16.xpose.msra.mxu0 0
        %314 = vmatprep.subr.bf16.mxu0 0
        %315 = vmatpush2.bf16.xpose.msra.mxu0 0
        %316 = vmatprep.mubr.bf16.mxu0 0
        %317 = vmatmul.mubr.bf16.gmra.mxu0 %v279
        %v318 = vpop.f32.mrf.mxu0
        %v319 = vadd.f32 0.0, %v318
        %v320 = vpop.f32.mrf.mxu0
        %v321 = vpop.f32.mrf.mxu0
        %v322 = vpop.f32.mrf.mxu0
        %323 = vdwg.mxu0
        %324 = vrot.lane.b32.xlu0 %v274, 96
        %v325 = vpop.permute.xlu0 %324
        %v327 = vsel %vm277, %v274, 0
        %v330 = vsel %vm277, %v325, 0
        %332 = vmatprep.subr.bf16.mxu0 0
        %333 = vmatpush1.bf16.xpose.msra.mxu0 0
        %334 = vmatprep.subr.bf16.mxu0 0
        %335 = vmatpush1.bf16.xpose.msra.mxu0 0
        %336 = vmatprep.subr.bf16.mxu0 0
        %337 = vmatpush1.bf16.xpose.msra.mxu0 0
        %338 = vmatprep.subr.bf16.mxu0 0
        %339 = vmatpush1.bf16.xpose.msra.mxu0 0
        %340 = vmatprep.subr.bf16.mxu0 0
        %341 = vmatpush1.bf16.xpose.msra.mxu0 0
        %342 = vmatprep.subr.bf16.mxu0 0
        %343 = vmatpush1.bf16.xpose.msra.mxu0 0
        %344 = vmatprep.subr.bf16.mxu0 0
        %345 = vmatpush1.bf16.xpose.msra.mxu0 0
        %346 = vmatprep.subr.bf16.mxu0 0
        %347 = vmatpush1.bf16.xpose.msra.mxu0 %v330
        %348 = vmatprep.subr.bf16.mxu0 0
        %349 = vmatpush2.bf16.xpose.msra.mxu0 0
        %350 = vmatprep.subr.bf16.mxu0 0
        %351 = vmatpush2.bf16.xpose.msra.mxu0 0
        %352 = vmatprep.subr.bf16.mxu0 0
        %353 = vmatpush2.bf16.xpose.msra.mxu0 0
        %354 = vmatprep.subr.bf16.mxu0 0
        %355 = vmatpush2.bf16.xpose.msra.mxu0 0
        %356 = vmatprep.subr.bf16.mxu0 0
        %357 = vmatpush2.bf16.xpose.msra.mxu0 0
        %358 = vmatprep.subr.bf16.mxu0 0
        %359 = vmatpush2.bf16.xpose.msra.mxu0 0
        %360 = vmatprep.subr.bf16.mxu0 0
        %361 = vmatpush2.bf16.xpose.msra.mxu0 0
        %362 = vmatprep.subr.bf16.mxu0 0
        %363 = vmatpush2.bf16.xpose.msra.mxu0 0
        %364 = vmatprep.mubr.bf16.mxu0 0
        %365 = vmatmul.mubr.bf16.gmra.mxu0 %v327
        %v366 = vpop.f32.mrf.mxu0
        %v367 = vadd.f32 0.0, %v366
        %v368 = vpop.f32.mrf.mxu0
        %v369 = vpop.f32.mrf.mxu0
        %v370 = vpop.f32.mrf.mxu0
        %371 = vdwg.mxu0
        %vm372 = vcmask 64512
        %v373 = vsel %vm372, %v319, -inf
        %374 = vmax.xlane.f32.xlu0 %v373
        %v375 = vpop.xlane.xlu0 %374
        %v376 = vsel %vm372, %v367, -inf
        %377 = vmax.xlane.f32.xlu0 %v376
        %v378 = vpop.xlane.xlu0 %377
        %v379 = vsub.f32 %v319, %v375
        %v380 = vsub.f32 %v367, %v378
        %v381 = vmul.f32 %v379, 1.442695
        %v382 = vpow.pop %v381
        %v383 = vmul.f32 %v380, 1.442695
        %v384 = vpow.pop %v383
        %v385 = vsel %vm372, %v382, 0.0
        %386 = vadd.xlane.f32.xlu0 %v385
        %v387 = vpop.xlane.xlu0 %386
        %v388 = vsel %vm372, %v384, 0.0
        %389 = vadd.xlane.f32.xlu0 %v388
        %v390 = vpop.xlane.xlu0 %389
        %v391 = vrcp.pop %v387
        %v392 = vrcp.pop %v390
        %v393 = vmul.f32 %v382, %v391
        %v394 = vmul.f32 %v384, %v392
        %v395 = vpack.c.bf16 %v393, %v393
        %v396 = vpack.c.bf16 %v394, %v394
        %397 = vrot.lane.b32.xlu0 %v271, 64
        %v398 = vpop.permute.xlu0 %397
        %v400 = vsel %vm372, %v395, 0
        %vm402 = vcmask 1043456
        %v404 = vsel %vm402, %v398, 0
        %406 = vmatprep.subr.bf16.mxu0 0
        %407 = vmatpush1.bf16.msra.mxu0 0
        %408 = vmatprep.subr.bf16.mxu0 0
        %409 = vmatpush1.bf16.msra.mxu0 0
        %410 = vmatprep.subr.bf16.mxu0 0
        %411 = vmatpush1.bf16.msra.mxu0 0
        %412 = vmatprep.subr.bf16.mxu0 0
        %413 = vmatpush1.bf16.msra.mxu0 0
        %414 = vmatprep.subr.bf16.mxu0 0
        %415 = vmatpush1.bf16.msra.mxu0 0
        %416 = vmatprep.subr.bf16.mxu0 0
        %417 = vmatpush1.bf16.msra.mxu0 0
        %418 = vmatprep.subr.bf16.mxu0 0
        %419 = vmatpush1.bf16.msra.mxu0 0
        %420 = vmatprep.subr.bf16.mxu0 0
        %421 = vmatpush1.bf16.msra.mxu0 %v404
        %422 = vmatprep.subr.bf16.mxu0 0
        %423 = vmatpush2.bf16.msra.mxu0 0
        %424 = vmatprep.subr.bf16.mxu0 0
        %425 = vmatpush2.bf16.msra.mxu0 0
        %426 = vmatprep.subr.bf16.mxu0 0
        %427 = vmatpush2.bf16.msra.mxu0 0
        %428 = vmatprep.subr.bf16.mxu0 0
        %429 = vmatpush2.bf16.msra.mxu0 0
        %430 = vmatprep.subr.bf16.mxu0 0
        %431 = vmatpush2.bf16.msra.mxu0 0
        %432 = vmatprep.subr.bf16.mxu0 0
        %433 = vmatpush2.bf16.msra.mxu0 0
        %434 = vmatprep.subr.bf16.mxu0 0
        %435 = vmatpush2.bf16.msra.mxu0 0
        %436 = vmatprep.subr.bf16.mxu0 0
        %437 = vmatpush2.bf16.msra.mxu0 0
        %438 = vmatprep.mubr.bf16.mxu0 0
        %439 = vmatmul.mubr.bf16.gmra.mxu0 %v400
        %v440 = vpop.f32.mrf.mxu0
        %v441 = vadd.f32 0.0, %v440
        %v442 = vpop.f32.mrf.mxu0
        %v443 = vpop.f32.mrf.mxu0
        %v444 = vpop.f32.mrf.mxu0
        %445 = vdwg.mxu0
        %446 = vrot.lane.b32.xlu0 %v274, 64
        %v447 = vpop.permute.xlu0 %446
        %v449 = vsel %vm372, %v396, 0
        %v452 = vsel %vm402, %v447, 0
        %454 = vmatprep.subr.bf16.mxu0 0
        %455 = vmatpush1.bf16.msra.mxu0 0
        %456 = vmatprep.subr.bf16.mxu0 0
        %457 = vmatpush1.bf16.msra.mxu0 0
        %458 = vmatprep.subr.bf16.mxu0 0
        %459 = vmatpush1.bf16.msra.mxu0 0
        %460 = vmatprep.subr.bf16.mxu0 0
        %461 = vmatpush1.bf16.msra.mxu0 0
        %462 = vmatprep.subr.bf16.mxu0 0
        %463 = vmatpush1.bf16.msra.mxu0 0
        %464 = vmatprep.subr.bf16.mxu0 0
        %465 = vmatpush1.bf16.msra.mxu0 0
        %466 = vmatprep.subr.bf16.mxu0 0
        %467 = vmatpush1.bf16.msra.mxu0 0
        %468 = vmatprep.subr.bf16.mxu0 0
        %469 = vmatpush1.bf16.msra.mxu0 %v452
        %470 = vmatprep.subr.bf16.mxu0 0
        %471 = vmatpush2.bf16.msra.mxu0 0
        %472 = vmatprep.subr.bf16.mxu0 0
        %473 = vmatpush2.bf16.msra.mxu0 0
        %474 = vmatprep.subr.bf16.mxu0 0
        %475 = vmatpush2.bf16.msra.mxu0 0
        %476 = vmatprep.subr.bf16.mxu0 0
        %477 = vmatpush2.bf16.msra.mxu0 0
        %478 = vmatprep.subr.bf16.mxu0 0
        %479 = vmatpush2.bf16.msra.mxu0 0
        %480 = vmatprep.subr.bf16.mxu0 0
        %481 = vmatpush2.bf16.msra.mxu0 0
        %482 = vmatprep.subr.bf16.mxu0 0
        %483 = vmatpush2.bf16.msra.mxu0 0
        %484 = vmatprep.subr.bf16.mxu0 0
        %485 = vmatpush2.bf16.msra.mxu0 0
        %486 = vmatprep.mubr.bf16.mxu0 0
        %487 = vmatmul.mubr.bf16.gmra.mxu0 %v449
        %v488 = vpop.f32.mrf.mxu0
        %v489 = vadd.f32 0.0, %v488
        %v490 = vpop.f32.mrf.mxu0
        %v491 = vpop.f32.mrf.mxu0
        %v492 = vpop.f32.mrf.mxu0
        %493 = vdwg.mxu0
        %495 = vrot.lane.b32.xlu0 %v489, 16
        %v496 = vpop.permute.xlu0 %495
        %v498 = vsel %vm277, %v441, %v496
        %499 = vst.msk [vmem:[%s200] sm:$0xff] %vm227, %v498
        %s500 = sand.u32 %s97, 1
        %s501 = scalar_lea.sflag [#allocation4], %s500
        %s502 = sand.u32 %s97, 1
        %s503 = smul.addr %s502, 8
        %s504 = scalar_lea.vmem [#allocation7], %s503
        // Predicated region
        $region41: #{tpu_custom_call.1} parent=31 // pred_check
          %p505 = pneg %p107
        $region42: #{tpu_custom_call.1} parent=31 // pred_check_branch
          %507 = sbr.rel (%p505) target = $region44
        $region43: #{tpu_custom_call.1} parent=31 // pred_region
          %s509 = ssub.s32 128, 128
          %510 = vsyncadd %s501, %s509
          %s511 = smul.addr %s21, 128
          %s512 = scalar_lea.hbm %s3, %s511
          %s514 = sshll.u32 %s504, 4
          %s515 = int_to_ptr.vmem [resolvable:$true] %s514
          %517 = dma.vmem_to_hbm [thread:$0]  %s515, 128, %s512, %s501
        $region44: #{tpu_custom_call.1} parent=31 // pred_fallthru
          _
      $region32: #{tpu_custom_call.1} parent=5 // pred_fallthru
        _
      %p518 = scmp.le.s32.totalorder 2, %s16
      // Predicated region
      $region45: #{tpu_custom_call.1} parent=5 // pred_check
        %p519 = pneg %p518
      $region46: #{tpu_custom_call.1} parent=5 // pred_check_branch
        %521 = sbr.rel (%p519) target = $region48
      $region47: #{tpu_custom_call.1} parent=5 // pred_region
        %s522 = ssub.s32 %s16, 2
        // Predicated region
        $region49: #{tpu_custom_call.1} parent=47 // pred_check
          %p523 = pneg %p113
        $region50: #{tpu_custom_call.1} parent=47 // pred_check_branch
          %525 = sbr.rel (%p523) target = $region52
        $region51: #{tpu_custom_call.1} parent=47 // pred_region
          %s526 = sand.u32 %s98, 1
          %s527 = scalar_lea.sflag [#allocation4], %s526
          %s528 = sand.u32 %s98, 1
          %s529 = smul.addr %s528, 8
          %s530 = scalar_lea.vmem [#allocation7], %s529
          %531 = dma.done %s527, 128
        $region52: #{tpu_custom_call.1} parent=47 // pred_fallthru
          _
      $region48: #{tpu_custom_call.1} parent=5 // pred_fallthru
        _
    $region6: #{tpu_custom_call.1} parent=1 // loop_footer
      %s20 = sadd.s32 1, %s16
    $region7: #{tpu_custom_call.1} parent=1 // loop_footer_branch
      %15 = sbr.rel target = $region3
    $region8: #{tpu_custom_call.1} parent=1 // loop_exit
      _
    %532 = vsyncpa [#allocation3], 1
    %s533 = scalar_lea.sflag [#allocation3], 1
    %534 = vsyncpa %s533, 1
    %535 = vsyncpa [#allocation6], 1
    %536 = vsyncpa [#allocation4], 1
    %s537 = scalar_lea.sflag [#allocation4], 1
    %538 = vsyncpa %s537, 1

</llo_original>
